<compile_context>
chip_gen: v6e
topology: v6e:2x2x1
jax: 0.10.0
libtpu: 0.0.40
codegen_flags: <defaults>
</compile_context>

<pallas_src>
import functools

import jax
import jax.numpy as jnp
from jax.experimental import pallas as pl
from jax.experimental.pallas import tpu as pltpu

EPS = 1e-5


def _round_up(n: int, m: int) -> int:
    return ((n + m - 1) // m) * m


def _prenorm_fn_kernel(x_ref, gamma_ref, beta_ref, w_ref, b_ref, o_ref, *, inv_d):
    # x_ref:     (TR, Dp)  rows of the flattened, padded (rows, dim) input (f32)
    # gamma_ref: (1, Dp)   LayerNorm weight (f32, zero-padded past real dim)
    # beta_ref:  (1, Dp)   LayerNorm bias   (f32, zero-padded)
    # w_ref:     (Dp, Dp)  fn (Linear) weight in (in, out) layout, bf16, zero-padded
    # b_ref:     (1, Dp)   fn (Linear) bias (f32, zero-padded)
    x = x_ref[...].astype(jnp.float32)

    # LayerNorm over the REAL feature dim.  Padded columns are zero, so plain
    # sums are exact; divide by the real dim via inv_d.  Biased variance via
    # E[x^2] - mean^2, eps inside rsqrt -- matches PyTorch.
    mean = jnp.sum(x, axis=-1, keepdims=True) * inv_d
    mean_sq = jnp.sum(x * x, axis=-1, keepdims=True) * inv_d
    var = jnp.maximum(mean_sq - mean * mean, 0.0)
    x_hat = (x - mean) * jax.lax.rsqrt(var + EPS)
    y = x_hat * gamma_ref[...] + beta_ref[...]  # padded cols -> 0 (gamma/beta = 0)

    # fn(...) hot path: Linear(dim -> dim) on the MXU.  bf16 operands, f32 accum.
    out = jnp.dot(y.astype(jnp.bfloat16), w_ref[...],
                  preferred_element_type=jnp.float32)
    out = out + b_ref[...]

    o_ref[...] = out.astype(o_ref.dtype)


@functools.partial(
    jax.jit, static_argnames=("tile_rows", "d_real", "single_buffer_consts"))
def _prenorm_call(x2, gamma2, beta2, w_bf16, b2, *, tile_rows, d_real,
                  single_buffer_consts):
    rows_p, dp = x2.shape
    grid = (rows_p // tile_rows,)

    const_kwargs = (
        {"pipeline_mode": pl.Buffered(1)} if single_buffer_consts else {})
    const_bufs = 1 if single_buffer_consts else 2

    # VMEM budget: double-buffered x/out tiles + (single-buffered) constants,
    # with ~2x headroom for in-kernel temporaries.  Floor = 32 MiB (default
    # scoped limit), cap = 48 MiB so it also fits v7x's 64 MiB physical VMEM.
    est = (2 * tile_rows * dp * 4            # x blocks (f32, 2 buffers)
           + 2 * tile_rows * dp * 4          # out blocks (f32, 2 buffers)
           + const_bufs * dp * dp * 2        # W (bf16)
           + const_bufs * 3 * dp * 4)        # gamma, beta, bias (f32)
    vmem_limit = int(min(max(2 * est + (4 << 20), 32 << 20), 48 << 20))

    return pl.pallas_call(
        functools.partial(_prenorm_fn_kernel, inv_d=1.0 / d_real),
        out_shape=jax.ShapeDtypeStruct((rows_p, dp), x2.dtype),
        grid_spec=pltpu.PrefetchScalarGridSpec(
            num_scalar_prefetch=0,
            grid=grid,
            in_specs=[
                pl.BlockSpec((tile_rows, dp), lambda i: (i, 0)),           # x rows
                pl.BlockSpec((1, dp), lambda i: (0, 0), **const_kwargs),   # gamma
                pl.BlockSpec((1, dp), lambda i: (0, 0), **const_kwargs),   # beta
                pl.BlockSpec((dp, dp), lambda i: (0, 0), **const_kwargs),  # W
                pl.BlockSpec((1, dp), lambda i: (0, 0), **const_kwargs),   # b
            ],
            out_specs=pl.BlockSpec((tile_rows, dp), lambda i: (i, 0)),
        ),
        compiler_params=pltpu.CompilerParams(
            dimension_semantics=("parallel",),
            vmem_limit_bytes=vmem_limit),
    )(x2, gamma2, beta2, w_bf16, b2)


def prenorm_forward(x, gamma, beta, w, b, *, tile_rows=256):
    """x: (B, S, D). Returns fn(LayerNorm(x)) with fn = Linear(D, D), W in (in, out)."""
    B, S, D = x.shape
    rows = B * S

    # Effective row tile: multiple of 8 (sublane), never bigger than the
    # (rounded-up) row count.  Rows are zero-padded to a multiple of the tile
    # (zero rows normalize to beta and are sliced off afterwards).
    tr = _round_up(min(tile_rows, _round_up(rows, 8)), 8)
    rows_p = _round_up(rows, tr)
    # Feature dim padded to a multiple of 128 -> lane-dense loads/stores.
    dp = _round_up(D, 128)

    x2 = jnp.pad(x.reshape(rows, D).astype(jnp.float32),
                 ((0, rows_p - rows), (0, dp - D)))
    gamma2 = jnp.pad(gamma.astype(jnp.float32), (0, dp - D)).reshape(1, dp)
    beta2 = jnp.pad(beta.astype(jnp.float32), (0, dp - D)).reshape(1, dp)
    b2 = jnp.pad(b.astype(jnp.float32), (0, dp - D)).reshape(1, dp)
    # Cast W to bf16 ONCE here (outside the kernel / grid loop).
    w2 = jnp.pad(w.astype(jnp.bfloat16), ((0, dp - D), (0, dp - D)))

    out2 = None
    for single_buffer_consts in (True, False):
        try:
            out2 = _prenorm_call(x2, gamma2, beta2, w2, b2,
                                 tile_rows=tr, d_real=D,
                                 single_buffer_consts=single_buffer_consts)
            out2 = jax.block_until_ready(out2)
            break
        except Exception:
            # Fallback: drop the single-buffering request for constant inputs
            # if this JAX build does not support pipeline_mode=pl.Buffered(1).
            if not single_buffer_consts:
                raise

    return out2[:rows, :D].reshape(B, S, D).astype(x.dtype)


def _reference(x, gamma, beta, w, b, *, matmul_dtype=jnp.float32):
    xf = x.astype(jnp.float32)
    mean = jnp.mean(xf, axis=-1, keepdims=True)
    mean_sq = jnp.mean(xf * xf, axis=-1, keepdims=True)
    var = jnp.maximum(mean_sq - mean * mean, 0.0)
    y = (xf - mean) * jax.lax.rsqrt(var + EPS) * gamma + beta
    out = jnp.einsum("bsd,de->bse", y.astype(matmul_dtype), w.astype(matmul_dtype),
                     preferred_element_type=jnp.float32)
    return out + b


if __name__ == "__main__":
    # Small shapes: batch=2, seq=8, dim=32.
    B, S, D = 2, 8, 32
    key = jax.random.PRNGKey(0)
    kx, kg, kb, kw, kwb = jax.random.split(key, 5)

    x = jax.random.normal(kx, (B, S, D), dtype=jnp.float32)

    # Deterministic synthetic parameters (shapes from nn.LayerNorm(dim) and the
    # representative fn = Linear(dim, dim)).  NOTE: W here is (in, out); a real
    # PyTorch nn.Linear weight is stored (out, in) and must be transposed when
    # wiring real checkpoints in.
    gamma = 1.0 + 0.1 * jax.random.normal(kg, (D,), dtype=jnp.float32)
    beta = 0.1 * jax.random.normal(kb, (D,), dtype=jnp.float32)
    w = jax.random.normal(kw, (D, D), dtype=jnp.float32) / jnp.sqrt(D)
    b = 0.1 * jax.random.normal(kwb, (D,), dtype=jnp.float32)

    # TODO(synk): `fn` in PreNorm is an arbitrary nn.Module; a Linear(dim, dim)
    # stands in for its matmul hot path here.

    out = prenorm_forward(x, gamma, beta, w, b)
    out = jax.block_until_ready(out)
    assert out.shape == (B, S, D)

    # Strict check vs a reference that mirrors the kernel numerics
    # (f32 LayerNorm, bf16 matmul operands, f32 accumulation).
    ref_bf16 = _reference(x, gamma, beta, w, b, matmul_dtype=jnp.bfloat16)
    assert jnp.allclose(out, ref_bf16, atol=5e-3, rtol=5e-3), "mismatch vs bf16 ref"

    # Loose sanity check vs full-f32 math (difference = bf16 matmul rounding only).
    ref_f32 = _reference(x, gamma, beta, w, b, matmul_dtype=jnp.float32)
    assert jnp.allclose(out, ref_f32, atol=5e-2, rtol=5e-2), "mismatch vs f32 ref"

    print("KERNEL_OK")
</pallas_src>

<mosaic_0001>
module attributes {stable_mosaic.version = 11 : i64} {
  func.func @_prenorm_fn_kernel(%arg0: i32, %arg1: memref<16x128xf32, #tpu.memory_space<vmem>>, %arg2: memref<1x128xf32, #tpu.memory_space<vmem>>, %arg3: memref<1x128xf32, #tpu.memory_space<vmem>>, %arg4: memref<128x128xbf16, #tpu.memory_space<vmem>>, %arg5: memref<1x128xf32, #tpu.memory_space<vmem>>, %arg6: memref<16x128xf32, #tpu.memory_space<vmem>>) attributes {dimension_semantics = [#tpu.dimension_semantics<parallel>], iteration_bounds = array<i64: 1>, scalar_prefetch = 0 : i64, scratch_operands = 0 : i64, tpu.core_type = #tpu.core_type<tc>, window_params = [{transform_indices = @transform_0, window_bounds = array<i64: 16, 128>}, {pipeline_mode = #tpu.pipeline_mode<synchronous>, transform_indices = @transform_1, window_bounds = array<i64: 1, 128>}, {pipeline_mode = #tpu.pipeline_mode<synchronous>, transform_indices = @transform_2, window_bounds = array<i64: 1, 128>}, {pipeline_mode = #tpu.pipeline_mode<synchronous>, transform_indices = @transform_3, window_bounds = array<i64: 128, 128>}, {pipeline_mode = #tpu.pipeline_mode<synchronous>, transform_indices = @transform_4, window_bounds = array<i64: 1, 128>}, {transform_indices = @transform_5, window_bounds = array<i64: 16, 128>}]} {
    %c0 = arith.constant 0 : index
    %c0_0 = arith.constant 0 : index
    %0 = vector.load %arg1[%c0, %c0_0] : memref<16x128xf32, #tpu.memory_space<vmem>>, vector<16x128xf32>
    %cst = arith.constant dense<0.000000e+00> : vector<16xf32>
    %1 = vector.multi_reduction <add>, %0, %cst [1] : vector<16x128xf32> to vector<16xf32>
    %2 = vector.shape_cast %1 : vector<16xf32> to vector<16x1xf32>
    %cst_1 = arith.constant 3.125000e-02 : f32
    %3 = vector.broadcast %cst_1 : f32 to vector<16x1xf32>
    %4 = arith.mulf %2, %3 : vector<16x1xf32>
    %5 = arith.mulf %0, %0 : vector<16x128xf32>
    %cst_2 = arith.constant dense<0.000000e+00> : vector<16xf32>
    %6 = vector.multi_reduction <add>, %5, %cst_2 [1] : vector<16x128xf32> to vector<16xf32>
    %7 = vector.shape_cast %6 : vector<16xf32> to vector<16x1xf32>
    %cst_3 = arith.constant 3.125000e-02 : f32
    %8 = vector.broadcast %cst_3 : f32 to vector<16x1xf32>
    %9 = arith.mulf %7, %8 : vector<16x1xf32>
    %10 = arith.mulf %4, %4 : vector<16x1xf32>
    %11 = arith.subf %9, %10 : vector<16x1xf32>
    %cst_4 = arith.constant 0.000000e+00 : f32
    %12 = vector.broadcast %cst_4 : f32 to vector<16x1xf32>
    %13 = arith.maximumf %11, %12 : vector<16x1xf32>
    %14 = vector.broadcast %4 : vector<16x1xf32> to vector<16x128xf32>
    %15 = arith.subf %0, %14 : vector<16x128xf32>
    %cst_5 = arith.constant 9.99999974E-6 : f32
    %16 = vector.broadcast %cst_5 : f32 to vector<16x1xf32>
    %17 = arith.addf %13, %16 : vector<16x1xf32>
    %18 = math.rsqrt %17 : vector<16x1xf32>
    %19 = vector.broadcast %18 : vector<16x1xf32> to vector<16x128xf32>
    %20 = arith.mulf %15, %19 : vector<16x128xf32>
    %c0_6 = arith.constant 0 : index
    %c0_7 = arith.constant 0 : index
    %21 = vector.load %arg2[%c0_6, %c0_7] : memref<1x128xf32, #tpu.memory_space<vmem>>, vector<1x128xf32>
    %22 = vector.broadcast %21 : vector<1x128xf32> to vector<16x128xf32>
    %23 = arith.mulf %20, %22 : vector<16x128xf32>
    %c0_8 = arith.constant 0 : index
    %c0_9 = arith.constant 0 : index
    %24 = vector.load %arg3[%c0_8, %c0_9] : memref<1x128xf32, #tpu.memory_space<vmem>>, vector<1x128xf32>
    %25 = vector.broadcast %24 : vector<1x128xf32> to vector<16x128xf32>
    %26 = arith.addf %23, %25 : vector<16x128xf32>
    %27 = arith.truncf %26 : vector<16x128xf32> to vector<16x128xbf16>
    %c0_10 = arith.constant 0 : index
    %c0_11 = arith.constant 0 : index
    %28 = vector.load %arg4[%c0_10, %c0_11] : memref<128x128xbf16, #tpu.memory_space<vmem>>, vector<128x128xbf16>
    %cst_12 = arith.constant dense<0.000000e+00> : vector<16x128xf32>
    %29 = tpu.matmul %27, %28, %cst_12 {dimension_numbers = #tpu.dot_dimension_numbers<[1], [0], [0], [1], [0, 0, 1, 1], [], []>} : vector<16x128xbf16>, vector<128x128xbf16>, vector<16x128xf32> -> vector<16x128xf32>
    %c0_13 = arith.constant 0 : index
    %c0_14 = arith.constant 0 : index
    %30 = vector.load %arg5[%c0_13, %c0_14] : memref<1x128xf32, #tpu.memory_space<vmem>>, vector<1x128xf32>
    %31 = vector.broadcast %30 : vector<1x128xf32> to vector<16x128xf32>
    %32 = arith.addf %29, %31 : vector<16x128xf32>
    %c0_15 = arith.constant 0 : index
    %c0_16 = arith.constant 0 : index
    %33 = vector.load %arg6[%c0_15, %c0_16] : memref<16x128xf32, #tpu.memory_space<vmem>>, vector<16x128xf32>
    tpu.vector_store %arg6[%c0_15, %c0_16], %32 {strides = array<i32>} : memref<16x128xf32, #tpu.memory_space<vmem>>, vector<16x128xf32>,
    return
  }
  func.func @transform_0(%arg0: i32) -> (i32, i32) {
    %c0_i32 = arith.constant 0 : i32
    %c0_i32_0 = arith.constant 0 : i32
    return %arg0, %c0_i32 : i32, i32
  }
  func.func @transform_1(%arg0: i32) -> (i32, i32) {
    %c0_i32 = arith.constant 0 : i32
    %c0_i32_0 = arith.constant 0 : i32
    %c0_i32_1 = arith.constant 0 : i32
    return %c0_i32, %c0_i32_0 : i32, i32
  }
  func.func @transform_2(%arg0: i32) -> (i32, i32) {
    %c0_i32 = arith.constant 0 : i32
    %c0_i32_0 = arith.constant 0 : i32
    %c0_i32_1 = arith.constant 0 : i32
    return %c0_i32, %c0_i32_0 : i32, i32
  }
  func.func @transform_3(%arg0: i32) -> (i32, i32) {
    %c0_i32 = arith.constant 0 : i32
    %c0_i32_0 = arith.constant 0 : i32
    %c0_i32_1 = arith.constant 0 : i32
    return %c0_i32, %c0_i32_0 : i32, i32
  }
  func.func @transform_4(%arg0: i32) -> (i32, i32) {
    %c0_i32 = arith.constant 0 : i32
    %c0_i32_0 = arith.constant 0 : i32
    %c0_i32_1 = arith.constant 0 : i32
    return %c0_i32, %c0_i32_0 : i32, i32
  }
  func.func @transform_5(%arg0: i32) -> (i32, i32) {
    %c0_i32 = arith.constant 0 : i32
    %c0_i32_0 = arith.constant 0 : i32
    return %arg0, %c0_i32 : i32, i32
  }
}

module attributes {stable_mosaic.version = 11 : i64} {
  func.func @_prenorm_fn_kernel(%arg0: i32, %arg1: memref<16x128xf32, #tpu.memory_space<vmem>>, %arg2: memref<1x128xf32, #tpu.memory_space<vmem>>, %arg3: memref<1x128xf32, #tpu.memory_space<vmem>>, %arg4: memref<128x128xbf16, #tpu.memory_space<vmem>>, %arg5: memref<1x128xf32, #tpu.memory_space<vmem>>, %arg6: memref<16x128xf32, #tpu.memory_space<vmem>>) attributes {dimension_semantics = [#tpu.dimension_semantics<parallel>], iteration_bounds = array<i64: 1>, scalar_prefetch = 0 : i64, scratch_operands = 0 : i64, tpu.core_type = #tpu.core_type<tc>, window_params = [{transform_indices = @transform_0, window_bounds = array<i64: 16, 128>}, {pipeline_mode = #tpu.pipeline_mode<synchronous>, transform_indices = @transform_1, window_bounds = array<i64: 1, 128>}, {pipeline_mode = #tpu.pipeline_mode<synchronous>, transform_indices = @transform_2, window_bounds = array<i64: 1, 128>}, {pipeline_mode = #tpu.pipeline_mode<synchronous>, transform_indices = @transform_3, window_bounds = array<i64: 128, 128>}, {pipeline_mode = #tpu.pipeline_mode<synchronous>, transform_indices = @transform_4, window_bounds = array<i64: 1, 128>}, {transform_indices = @transform_5, window_bounds = array<i64: 16, 128>}]} {
    %c0 = arith.constant 0 : index
    %c0_0 = arith.constant 0 : index
    %0 = vector.load %arg1[%c0, %c0_0] : memref<16x128xf32, #tpu.memory_space<vmem>>, vector<16x128xf32>
    %cst = arith.constant dense<0.000000e+00> : vector<16xf32>
    %1 = vector.multi_reduction <add>, %0, %cst [1] : vector<16x128xf32> to vector<16xf32>
    %2 = vector.shape_cast %1 : vector<16xf32> to vector<16x1xf32>
    %cst_1 = arith.constant 3.125000e-02 : f32
    %3 = vector.broadcast %cst_1 : f32 to vector<16x1xf32>
    %4 = arith.mulf %2, %3 : vector<16x1xf32>
    %5 = arith.mulf %0, %0 : vector<16x128xf32>
    %cst_2 = arith.constant dense<0.000000e+00> : vector<16xf32>
    %6 = vector.multi_reduction <add>, %5, %cst_2 [1] : vector<16x128xf32> to vector<16xf32>
    %7 = vector.shape_cast %6 : vector<16xf32> to vector<16x1xf32>
    %cst_3 = arith.constant 3.125000e-02 : f32
    %8 = vector.broadcast %cst_3 : f32 to vector<16x1xf32>
    %9 = arith.mulf %7, %8 : vector<16x1xf32>
    %10 = arith.mulf %4, %4 : vector<16x1xf32>
    %11 = arith.subf %9, %10 : vector<16x1xf32>
    %cst_4 = arith.constant 0.000000e+00 : f32
    %12 = vector.broadcast %cst_4 : f32 to vector<16x1xf32>
    %13 = arith.maximumf %11, %12 : vector<16x1xf32>
    %14 = vector.broadcast %4 : vector<16x1xf32> to vector<16x128xf32>
    %15 = arith.subf %0, %14 : vector<16x128xf32>
    %cst_5 = arith.constant 9.99999974E-6 : f32
    %16 = vector.broadcast %cst_5 : f32 to vector<16x1xf32>
    %17 = arith.addf %13, %16 : vector<16x1xf32>
    %18 = math.rsqrt %17 : vector<16x1xf32>
    %19 = vector.broadcast %18 : vector<16x1xf32> to vector<16x128xf32>
    %20 = arith.mulf %15, %19 : vector<16x128xf32>
    %c0_6 = arith.constant 0 : index
    %c0_7 = arith.constant 0 : index
    %21 = vector.load %arg2[%c0_6, %c0_7] : memref<1x128xf32, #tpu.memory_space<vmem>>, vector<1x128xf32>
    %22 = vector.broadcast %21 : vector<1x128xf32> to vector<16x128xf32>
    %23 = arith.mulf %20, %22 : vector<16x128xf32>
    %c0_8 = arith.constant 0 : index
    %c0_9 = arith.constant 0 : index
    %24 = vector.load %arg3[%c0_8, %c0_9] : memref<1x128xf32, #tpu.memory_space<vmem>>, vector<1x128xf32>
    %25 = vector.broadcast %24 : vector<1x128xf32> to vector<16x128xf32>
    %26 = arith.addf %23, %25 : vector<16x128xf32>
    %27 = arith.truncf %26 : vector<16x128xf32> to vector<16x128xbf16>
    %c0_10 = arith.constant 0 : index
    %c0_11 = arith.constant 0 : index
    %28 = vector.load %arg4[%c0_10, %c0_11] : memref<128x128xbf16, #tpu.memory_space<vmem>>, vector<128x128xbf16>
    %cst_12 = arith.constant dense<0.000000e+00> : vector<16x128xf32>
    %29 = tpu.matmul %27, %28, %cst_12 {dimension_numbers = #tpu.dot_dimension_numbers<[1], [0], [0], [1], [0, 0, 1, 1], [], []>} : vector<16x128xbf16>, vector<128x128xbf16>, vector<16x128xf32> -> vector<16x128xf32>
    %c0_13 = arith.constant 0 : index
    %c0_14 = arith.constant 0 : index
    %30 = vector.load %arg5[%c0_13, %c0_14] : memref<1x128xf32, #tpu.memory_space<vmem>>, vector<1x128xf32>
    %31 = vector.broadcast %30 : vector<1x128xf32> to vector<16x128xf32>
    %32 = arith.addf %29, %31 : vector<16x128xf32>
    %c0_15 = arith.constant 0 : index
    %c0_16 = arith.constant 0 : index
    %33 = vector.load %arg6[%c0_15, %c0_16] : memref<16x128xf32, #tpu.memory_space<vmem>>, vector<16x128xf32>
    tpu.vector_store %arg6[%c0_15, %c0_16], %32 {strides = array<i32>} : memref<16x128xf32, #tpu.memory_space<vmem>>, vector<16x128xf32>,
    return
  }
  func.func @transform_0(%arg0: i32) -> (i32, i32) {
    %c0_i32 = arith.constant 0 : i32
    %c0_i32_0 = arith.constant 0 : i32
    return %arg0, %c0_i32 : i32, i32
  }
  func.func @transform_1(%arg0: i32) -> (i32, i32) {
    %c0_i32 = arith.constant 0 : i32
    %c0_i32_0 = arith.constant 0 : i32
    %c0_i32_1 = arith.constant 0 : i32
    return %c0_i32, %c0_i32_0 : i32, i32
  }
  func.func @transform_2(%arg0: i32) -> (i32, i32) {
    %c0_i32 = arith.constant 0 : i32
    %c0_i32_0 = arith.constant 0 : i32
    %c0_i32_1 = arith.constant 0 : i32
    return %c0_i32, %c0_i32_0 : i32, i32
  }
  func.func @transform_3(%arg0: i32) -> (i32, i32) {
    %c0_i32 = arith.constant 0 : i32
    %c0_i32_0 = arith.constant 0 : i32
    %c0_i32_1 = arith.constant 0 : i32
    return %c0_i32, %c0_i32_0 : i32, i32
  }
  func.func @transform_4(%arg0: i32) -> (i32, i32) {
    %c0_i32 = arith.constant 0 : i32
    %c0_i32_0 = arith.constant 0 : i32
    %c0_i32_1 = arith.constant 0 : i32
    return %c0_i32, %c0_i32_0 : i32, i32
  }
  func.func @transform_5(%arg0: i32) -> (i32, i32) {
    %c0_i32 = arith.constant 0 : i32
    %c0_i32_0 = arith.constant 0 : i32
    return %arg0, %c0_i32 : i32, i32
  }
}

</mosaic_0001>

<llo_original>
// kernel: _prenorm_call.1
$region0: #{_prenorm_call.1}
  #allocation0 [shape = 'u32[]', space=smem, size = 0x4, offset = 0x4, fixed_abs, tag = 'smem constant byte address 0x4 - core index']
  #allocation1 [shape = 'u32[144,128]{1,0:T(1,128)}', space=vmem, size = 0x12000, scoped, tag = 'internal scratch']
  %s0 = inlined_call_operand.hbm [shape: f32[16,128], index: 0, kind: input, shape index: {}]
  %s1 = inlined_call_operand.vmem [shape: f32[1,128], index: 1, kind: input, shape index: {}]
  %s2 = inlined_call_operand.vmem [shape: f32[1,128], index: 2, kind: input, shape index: {}]
  %s3 = inlined_call_operand.hbm [shape: bf16[128,128], index: 3, kind: input, shape index: {}]
  %s4 = inlined_call_operand.vmem [shape: f32[1,128], index: 4, kind: input, shape index: {}]
  %s5 = inlined_call_operand.hbm [shape: f32[16,128], index: 5, kind: output, shape index: {}]
  %s6 = sld [smem:[#allocation0]]
  $region38: #{_prenorm_call.1} parent=0
    _
  %s8 = ssub.s32 1, %s6
  %s9 = scalar_select 0, %s8, %s6
  $region1: #{_prenorm_call.1} parent=0
    #allocation2 [shape = 'u8[8192]{0}', space=vmem, size = 0x2000, scoped, tag = 'input window, operand 0, single buffered']
    #allocation3 [shape = 's32[1]{0}', space=sflag, size = 0x4, scoped, tag = 'scoped memory for _prenorm_call.1']
    #allocation4 [shape = 's32[1]{0}', space=sflag, size = 0x4, scoped, tag = 'scoped memory for _prenorm_call.1']
    #allocation5 [shape = 'u8[32768]{0}', space=vmem, size = 0x8000, scoped, tag = 'input window, operand 3, single buffered']
    #allocation6 [shape = 's32[1]{0}', space=sflag, size = 0x4, scoped, tag = 'scoped memory for _prenorm_call.1']
    #allocation7 [shape = 'u8[8192]{0}', space=vmem, size = 0x2000, scoped, tag = 'output window, operand 0, single buffered']
    %10 = vsyncpa [#allocation3], 0
    %11 = vsyncpa [#allocation6], 0
    %12 = vsyncpa [#allocation4], 0
    // Predicated region
    $region2: #{_prenorm_call.1} parent=1 // pred_check
      _
    $region3: #{_prenorm_call.1} parent=1 // pred_check_branch
      %14 = sbr.rel (0) target = $region5
    $region4: #{_prenorm_call.1} parent=1 // pred_region
      %s16 = ssub.s32 256, 256
      %17 = vsyncadd [#allocation3], %s16
      %s18 = sshll.u32 [#allocation2], 4
      %s19 = int_to_ptr.vmem [resolvable:$true] %s18
      %24 = dma.hbm_to_vmem [thread:$0]  %s0, 256, %s19, [#allocation3], 128, 128, 8
    $region5: #{_prenorm_call.1} parent=1 // pred_fallthru
      _
    // Predicated region
    $region6: #{_prenorm_call.1} parent=1 // pred_check
      _
    $region7: #{_prenorm_call.1} parent=1 // pred_check_branch
      %26 = sbr.rel (0) target = $region9
    $region8: #{_prenorm_call.1} parent=1 // pred_region
      _
    $region9: #{_prenorm_call.1} parent=1 // pred_fallthru
      _
    // Predicated region
    $region10: #{_prenorm_call.1} parent=1 // pred_check
      _
    $region11: #{_prenorm_call.1} parent=1 // pred_check_branch
      %28 = sbr.rel (0) target = $region13
    $region12: #{_prenorm_call.1} parent=1 // pred_region
      _
    $region13: #{_prenorm_call.1} parent=1 // pred_fallthru
      _
    // Predicated region
    $region14: #{_prenorm_call.1} parent=1 // pred_check
      _
    $region15: #{_prenorm_call.1} parent=1 // pred_check_branch
      %30 = sbr.rel (0) target = $region17
    $region16: #{_prenorm_call.1} parent=1 // pred_region
      %s32 = ssub.s32 1024, 1024
      %33 = vsyncadd [#allocation6], %s32
      %s34 = sshll.u32 [#allocation5], 4
      %s35 = int_to_ptr.vmem [resolvable:$true] %s34
      %40 = dma.hbm_to_vmem [thread:$0]  %s3, 1024, %s35, [#allocation6], 64, 64, 4
    $region17: #{_prenorm_call.1} parent=1 // pred_fallthru
      _
    // Predicated region
    $region18: #{_prenorm_call.1} parent=1 // pred_check
      _
    $region19: #{_prenorm_call.1} parent=1 // pred_check_branch
      %42 = sbr.rel (0) target = $region21
    $region20: #{_prenorm_call.1} parent=1 // pred_region
      _
    $region21: #{_prenorm_call.1} parent=1 // pred_fallthru
      _
    // Predicated region
    $region22: #{_prenorm_call.1} parent=1 // pred_check
      _
    $region23: #{_prenorm_call.1} parent=1 // pred_check_branch
      %44 = sbr.rel (0) target = $region25
    $region24: #{_prenorm_call.1} parent=1 // pred_region
      %45 = dma.done [#allocation3], 256
    $region25: #{_prenorm_call.1} parent=1 // pred_fallthru
      _
    // Predicated region
    $region26: #{_prenorm_call.1} parent=1 // pred_check
      _
    $region27: #{_prenorm_call.1} parent=1 // pred_check_branch
      %47 = sbr.rel (0) target = $region29
    $region28: #{_prenorm_call.1} parent=1 // pred_region
      %48 = dma.done [#allocation6], 1024
    $region29: #{_prenorm_call.1} parent=1 // pred_fallthru
      _
    %v50 = vld [vmem:[#allocation2] sm:$0xff]
    %v51 = vld [vmem:[#allocation2 + $0x8] sm:$0xff]
    %52 = vadd.xlane.f32.xlu0 %v50
    %v53 = vpop.xlane.xlu0 %52
    %54 = vadd.xlane.f32.xlu0 %v51
    %v55 = vpop.xlane.xlu0 %54
    %v56 = vmul.f32 %v53, 0.03125
    %v57 = vmul.f32 %v55, 0.03125
    %v58 = vmul.f32 %v50, %v50
    %v59 = vmul.f32 %v51, %v51
    %60 = vadd.xlane.f32.xlu0 %v58
    %v61 = vpop.xlane.xlu0 %60
    %62 = vadd.xlane.f32.xlu0 %v59
    %v63 = vpop.xlane.xlu0 %62
    %v64 = vmul.f32 %v61, 0.03125
    %v65 = vmul.f32 %v63, 0.03125
    %v66 = vmul.f32 %v56, %v56
    %v67 = vmul.f32 %v57, %v57
    %v68 = vsub.f32 %v64, %v66
    %v69 = vsub.f32 %v65, %v67
    %v70 = vmax.f32 %v68, 0.0
    %v71 = vmax.f32 %v69, 0.0
    %v72 = vsub.f32 %v50, %v56
    %v73 = vsub.f32 %v51, %v57
    %v74 = vadd.f32 %v70, 1e-05
    %v75 = vadd.f32 %v71, 1e-05
    %v76 = vrsqrt.pop %v74
    %v77 = vrsqrt.pop %v75
    %v78 = vmul.f32 %v72, %v76
    %v79 = vmul.f32 %v73, %v77
    %v80 = vld [vmem:[%s1] sm:$0x1]
    %v82 = vlaneseq
    %v83 = vshrl.u32 %v82, 7
    %v84 = vsub.s32 0, %v83
    %v85 = vrot.slane %v80, %v84
    %v87 = vmul.f32 %v78, %v85
    %v88 = vmul.f32 %v79, %v85
    %v89 = vld [vmem:[%s2] sm:$0x1]
    %v91 = vlaneseq
    %v92 = vshrl.u32 %v91, 7
    %v93 = vsub.s32 0, %v92
    %v94 = vrot.slane %v89, %v93
    %v96 = vadd.f32 %v87, %v94
    %v97 = vadd.f32 %v88, %v94
    %v98 = vpack.c.bf16 %v97, %v96
    %v99 = vld [vmem:[#allocation5] sm:$0xf]
    %v100 = vld [vmem:[#allocation5 + $0x4] sm:$0xf]
    %v101 = vld [vmem:[#allocation5 + $0x8] sm:$0xf]
    %v102 = vld [vmem:[#allocation5 + $0xc] sm:$0xf]
    %v103 = vld [vmem:[#allocation5 + $0x10] sm:$0xf]
    %v104 = vld [vmem:[#allocation5 + $0x14] sm:$0xf]
    %v105 = vld [vmem:[#allocation5 + $0x18] sm:$0xf]
    %v106 = vld [vmem:[#allocation5 + $0x1c] sm:$0xf]
    %v107 = vld [vmem:[#allocation5 + $0x20] sm:$0xf]
    %v108 = vld [vmem:[#allocation5 + $0x24] sm:$0xf]
    %v109 = vld [vmem:[#allocation5 + $0x28] sm:$0xf]
    %v110 = vld [vmem:[#allocation5 + $0x2c] sm:$0xf]
    %v111 = vld [vmem:[#allocation5 + $0x30] sm:$0xf]
    %v112 = vld [vmem:[#allocation5 + $0x34] sm:$0xf]
    %v113 = vld [vmem:[#allocation5 + $0x38] sm:$0xf]
    %v114 = vld [vmem:[#allocation5 + $0x3c] sm:$0xf]
    %v115 = vld [vmem:[%s4] sm:$0x1]
    %v117 = vlaneseq
    %v118 = vshrl.u32 %v117, 7
    %v119 = vsub.s32 0, %v118
    %v120 = vrot.slane %v115, %v119
    %v138 = vunpack.c.l.b16 %v99
    %v139 = vunpack.c.l.b16 %v100
    %v140 = vunpack.c.l.b16 %v101
    %v141 = vunpack.c.l.b16 %v102
    %v142 = vunpack.c.l.b16 %v103
    %v143 = vunpack.c.l.b16 %v104
    %v144 = vunpack.c.l.b16 %v105
    %v145 = vunpack.c.l.b16 %v106
    %v146 = vunpack.c.l.b16 %v107
    %v147 = vunpack.c.l.b16 %v108
    %v148 = vunpack.c.l.b16 %v109
    %v149 = vunpack.c.l.b16 %v110
    %v150 = vunpack.c.l.b16 %v111
    %v151 = vunpack.c.l.b16 %v112
    %v152 = vunpack.c.l.b16 %v113
    %v153 = vunpack.c.l.b16 %v114
    %v154 = vpack.c.b16 %v139, %v138
    %v155 = vpack.c.b16 %v141, %v140
    %v156 = vpack.c.b16 %v143, %v142
    %v157 = vpack.c.b16 %v145, %v144
    %v158 = vpack.c.b16 %v147, %v146
    %v159 = vpack.c.b16 %v149, %v148
    %v160 = vpack.c.b16 %v151, %v150
    %v161 = vpack.c.b16 %v153, %v152
    %170 = vmatprep.subr.bf16.mxu0 0
    %171 = vmatpush1.bf16.msra.mxu0 %v161
    %172 = vmatprep.subr.bf16.mxu0 0
    %173 = vmatpush1.bf16.msra.mxu0 %v160
    %174 = vmatprep.subr.bf16.mxu0 0
    %175 = vmatpush1.bf16.msra.mxu0 %v159
    %176 = vmatprep.subr.bf16.mxu0 0
    %177 = vmatpush1.bf16.msra.mxu0 %v158
    %178 = vmatprep.subr.bf16.mxu0 0
    %179 = vmatpush1.bf16.msra.mxu0 %v157
    %180 = vmatprep.subr.bf16.mxu0 0
    %181 = vmatpush1.bf16.msra.mxu0 %v156
    %182 = vmatprep.subr.bf16.mxu0 0
    %183 = vmatpush1.bf16.msra.mxu0 %v155
    %184 = vmatprep.subr.bf16.mxu0 0
    %185 = vmatpush1.bf16.msra.mxu0 %v154
    %186 = vmatprep.subr.bf16.mxu0 0
    %187 = vmatpush2.bf16.msra.mxu0 0
    %188 = vmatprep.subr.bf16.mxu0 0
    %189 = vmatpush2.bf16.msra.mxu0 0
    %190 = vmatprep.subr.bf16.mxu0 0
    %191 = vmatpush2.bf16.msra.mxu0 0
    %192 = vmatprep.subr.bf16.mxu0 0
    %193 = vmatpush2.bf16.msra.mxu0 0
    %194 = vmatprep.subr.bf16.mxu0 0
    %195 = vmatpush2.bf16.msra.mxu0 0
    %196 = vmatprep.subr.bf16.mxu0 0
    %197 = vmatpush2.bf16.msra.mxu0 0
    %198 = vmatprep.subr.bf16.mxu0 0
    %199 = vmatpush2.bf16.msra.mxu0 0
    %200 = vmatprep.subr.bf16.mxu0 0
    %201 = vmatpush2.bf16.msra.mxu0 0
    %202 = vmatprep.mubr.bf16.mxu0 0
    %203 = vmatmul.mubr.bf16.gmra.mxu0 %v98
    %v204 = vpop.f32.mrf.mxu0
    %v205 = vadd.f32 %v120, %v204
    %v206 = vpop.f32.mrf.mxu0
    %v207 = vpop.f32.mrf.mxu0
    %v208 = vadd.f32 %v120, %v207
    %v209 = vpop.f32.mrf.mxu0
    %210 = vdwg.mxu0
    %211 = vst [vmem:[#allocation7] sm:$0xff] %v205
    %212 = vst [vmem:[#allocation7 + $0x8] sm:$0xff] %v208
    // Predicated region
    $region30: #{_prenorm_call.1} parent=1 // pred_check
      _
    $region31: #{_prenorm_call.1} parent=1 // pred_check_branch
      %214 = sbr.rel (0) target = $region33
    $region32: #{_prenorm_call.1} parent=1 // pred_region
      %s216 = ssub.s32 256, 256
      %217 = vsyncadd [#allocation4], %s216
      %s218 = sshll.u32 [#allocation7], 4
      %s219 = int_to_ptr.vmem [resolvable:$true] %s218
      %224 = dma.vmem_to_hbm [thread:$0]  %s219, 256, %s5, [#allocation4], 128, 128, 8
    $region33: #{_prenorm_call.1} parent=1 // pred_fallthru
      _
    // Predicated region
    $region34: #{_prenorm_call.1} parent=1 // pred_check
      _
    $region35: #{_prenorm_call.1} parent=1 // pred_check_branch
      %226 = sbr.rel (0) target = $region37
    $region36: #{_prenorm_call.1} parent=1 // pred_region
      %227 = dma.done [#allocation4], 256
    $region37: #{_prenorm_call.1} parent=1 // pred_fallthru
      _
    %228 = vsyncpa [#allocation3], 1
    %229 = vsyncpa [#allocation6], 1
    %230 = vsyncpa [#allocation4], 1

// kernel: _prenorm_call.1
$region0: #{_prenorm_call.1}
  #allocation0 [shape = 'u32[]', space=smem, size = 0x4, offset = 0x4, fixed_abs, tag = 'smem constant byte address 0x4 - core index']
  #allocation1 [shape = 'u32[144,128]{1,0:T(1,128)}', space=vmem, size = 0x12000, scoped, tag = 'internal scratch']
  %s0 = inlined_call_operand.hbm [shape: f32[16,128], index: 0, kind: input, shape index: {}]
  %s1 = inlined_call_operand.vmem [shape: f32[1,128], index: 1, kind: input, shape index: {}]
  %s2 = inlined_call_operand.vmem [shape: f32[1,128], index: 2, kind: input, shape index: {}]
  %s3 = inlined_call_operand.hbm [shape: bf16[128,128], index: 3, kind: input, shape index: {}]
  %s4 = inlined_call_operand.vmem [shape: f32[1,128], index: 4, kind: input, shape index: {}]
  %s5 = inlined_call_operand.hbm [shape: f32[16,128], index: 5, kind: output, shape index: {}]
  %s6 = sld [smem:[#allocation0]]
  $region38: #{_prenorm_call.1} parent=0
    _
  %s8 = ssub.s32 1, %s6
  %s9 = scalar_select 0, %s8, %s6
  $region1: #{_prenorm_call.1} parent=0
    #allocation2 [shape = 'u8[8192]{0}', space=vmem, size = 0x2000, scoped, tag = 'input window, operand 0, single buffered']
    #allocation3 [shape = 's32[1]{0}', space=sflag, size = 0x4, scoped, tag = 'scoped memory for _prenorm_call.1']
    #allocation4 [shape = 's32[1]{0}', space=sflag, size = 0x4, scoped, tag = 'scoped memory for _prenorm_call.1']
    #allocation5 [shape = 'u8[32768]{0}', space=vmem, size = 0x8000, scoped, tag = 'input window, operand 3, single buffered']
    #allocation6 [shape = 's32[1]{0}', space=sflag, size = 0x4, scoped, tag = 'scoped memory for _prenorm_call.1']
    #allocation7 [shape = 'u8[8192]{0}', space=vmem, size = 0x2000, scoped, tag = 'output window, operand 0, single buffered']
    %10 = vsyncpa [#allocation3], 0
    %11 = vsyncpa [#allocation6], 0
    %12 = vsyncpa [#allocation4], 0
    // Predicated region
    $region2: #{_prenorm_call.1} parent=1 // pred_check
      _
    $region3: #{_prenorm_call.1} parent=1 // pred_check_branch
      %14 = sbr.rel (0) target = $region5
    $region4: #{_prenorm_call.1} parent=1 // pred_region
      %s16 = ssub.s32 256, 256
      %17 = vsyncadd [#allocation3], %s16
      %s18 = sshll.u32 [#allocation2], 4
      %s19 = int_to_ptr.vmem [resolvable:$true] %s18
      %24 = dma.hbm_to_vmem [thread:$0]  %s0, 256, %s19, [#allocation3], 128, 128, 8
    $region5: #{_prenorm_call.1} parent=1 // pred_fallthru
      _
    // Predicated region
    $region6: #{_prenorm_call.1} parent=1 // pred_check
      _
    $region7: #{_prenorm_call.1} parent=1 // pred_check_branch
      %26 = sbr.rel (0) target = $region9
    $region8: #{_prenorm_call.1} parent=1 // pred_region
      _
    $region9: #{_prenorm_call.1} parent=1 // pred_fallthru
      _
    // Predicated region
    $region10: #{_prenorm_call.1} parent=1 // pred_check
      _
    $region11: #{_prenorm_call.1} parent=1 // pred_check_branch
      %28 = sbr.rel (0) target = $region13
    $region12: #{_prenorm_call.1} parent=1 // pred_region
      _
    $region13: #{_prenorm_call.1} parent=1 // pred_fallthru
      _
    // Predicated region
    $region14: #{_prenorm_call.1} parent=1 // pred_check
      _
    $region15: #{_prenorm_call.1} parent=1 // pred_check_branch
      %30 = sbr.rel (0) target = $region17
    $region16: #{_prenorm_call.1} parent=1 // pred_region
      %s32 = ssub.s32 1024, 1024
      %33 = vsyncadd [#allocation6], %s32
      %s34 = sshll.u32 [#allocation5], 4
      %s35 = int_to_ptr.vmem [resolvable:$true] %s34
      %40 = dma.hbm_to_vmem [thread:$0]  %s3, 1024, %s35, [#allocation6], 64, 64, 4
    $region17: #{_prenorm_call.1} parent=1 // pred_fallthru
      _
    // Predicated region
    $region18: #{_prenorm_call.1} parent=1 // pred_check
      _
    $region19: #{_prenorm_call.1} parent=1 // pred_check_branch
      %42 = sbr.rel (0) target = $region21
    $region20: #{_prenorm_call.1} parent=1 // pred_region
      _
    $region21: #{_prenorm_call.1} parent=1 // pred_fallthru
      _
    // Predicated region
    $region22: #{_prenorm_call.1} parent=1 // pred_check
      _
    $region23: #{_prenorm_call.1} parent=1 // pred_check_branch
      %44 = sbr.rel (0) target = $region25
    $region24: #{_prenorm_call.1} parent=1 // pred_region
      %45 = dma.done [#allocation3], 256
    $region25: #{_prenorm_call.1} parent=1 // pred_fallthru
      _
    // Predicated region
    $region26: #{_prenorm_call.1} parent=1 // pred_check
      _
    $region27: #{_prenorm_call.1} parent=1 // pred_check_branch
      %47 = sbr.rel (0) target = $region29
    $region28: #{_prenorm_call.1} parent=1 // pred_region
      %48 = dma.done [#allocation6], 1024
    $region29: #{_prenorm_call.1} parent=1 // pred_fallthru
      _
    %v50 = vld [vmem:[#allocation2] sm:$0xff]
    %v51 = vld [vmem:[#allocation2 + $0x8] sm:$0xff]
    %52 = vadd.xlane.f32.xlu0 %v50
    %v53 = vpop.xlane.xlu0 %52
    %54 = vadd.xlane.f32.xlu0 %v51
    %v55 = vpop.xlane.xlu0 %54
    %v56 = vmul.f32 %v53, 0.03125
    %v57 = vmul.f32 %v55, 0.03125
    %v58 = vmul.f32 %v50, %v50
    %v59 = vmul.f32 %v51, %v51
    %60 = vadd.xlane.f32.xlu0 %v58
    %v61 = vpop.xlane.xlu0 %60
    %62 = vadd.xlane.f32.xlu0 %v59
    %v63 = vpop.xlane.xlu0 %62
    %v64 = vmul.f32 %v61, 0.03125
    %v65 = vmul.f32 %v63, 0.03125
    %v66 = vmul.f32 %v56, %v56
    %v67 = vmul.f32 %v57, %v57
    %v68 = vsub.f32 %v64, %v66
    %v69 = vsub.f32 %v65, %v67
    %v70 = vmax.f32 %v68, 0.0
    %v71 = vmax.f32 %v69, 0.0
    %v72 = vsub.f32 %v50, %v56
    %v73 = vsub.f32 %v51, %v57
    %v74 = vadd.f32 %v70, 1e-05
    %v75 = vadd.f32 %v71, 1e-05
    %v76 = vrsqrt.pop %v74
    %v77 = vrsqrt.pop %v75
    %v78 = vmul.f32 %v72, %v76
    %v79 = vmul.f32 %v73, %v77
    %v80 = vld [vmem:[%s1] sm:$0x1]
    %v82 = vlaneseq
    %v83 = vshrl.u32 %v82, 7
    %v84 = vsub.s32 0, %v83
    %v85 = vrot.slane %v80, %v84
    %v87 = vmul.f32 %v78, %v85
    %v88 = vmul.f32 %v79, %v85
    %v89 = vld [vmem:[%s2] sm:$0x1]
    %v91 = vlaneseq
    %v92 = vshrl.u32 %v91, 7
    %v93 = vsub.s32 0, %v92
    %v94 = vrot.slane %v89, %v93
    %v96 = vadd.f32 %v87, %v94
    %v97 = vadd.f32 %v88, %v94
    %v98 = vpack.c.bf16 %v97, %v96
    %v99 = vld [vmem:[#allocation5] sm:$0xf]
    %v100 = vld [vmem:[#allocation5 + $0x4] sm:$0xf]
    %v101 = vld [vmem:[#allocation5 + $0x8] sm:$0xf]
    %v102 = vld [vmem:[#allocation5 + $0xc] sm:$0xf]
    %v103 = vld [vmem:[#allocation5 + $0x10] sm:$0xf]
    %v104 = vld [vmem:[#allocation5 + $0x14] sm:$0xf]
    %v105 = vld [vmem:[#allocation5 + $0x18] sm:$0xf]
    %v106 = vld [vmem:[#allocation5 + $0x1c] sm:$0xf]
    %v107 = vld [vmem:[#allocation5 + $0x20] sm:$0xf]
    %v108 = vld [vmem:[#allocation5 + $0x24] sm:$0xf]
    %v109 = vld [vmem:[#allocation5 + $0x28] sm:$0xf]
    %v110 = vld [vmem:[#allocation5 + $0x2c] sm:$0xf]
    %v111 = vld [vmem:[#allocation5 + $0x30] sm:$0xf]
    %v112 = vld [vmem:[#allocation5 + $0x34] sm:$0xf]
    %v113 = vld [vmem:[#allocation5 + $0x38] sm:$0xf]
    %v114 = vld [vmem:[#allocation5 + $0x3c] sm:$0xf]
    %v115 = vld [vmem:[%s4] sm:$0x1]
    %v117 = vlaneseq
    %v118 = vshrl.u32 %v117, 7
    %v119 = vsub.s32 0, %v118
    %v120 = vrot.slane %v115, %v119
    %v138 = vunpack.c.l.b16 %v99
    %v139 = vunpack.c.l.b16 %v100
    %v140 = vunpack.c.l.b16 %v101
    %v141 = vunpack.c.l.b16 %v102
    %v142 = vunpack.c.l.b16 %v103
    %v143 = vunpack.c.l.b16 %v104
    %v144 = vunpack.c.l.b16 %v105
    %v145 = vunpack.c.l.b16 %v106
    %v146 = vunpack.c.l.b16 %v107
    %v147 = vunpack.c.l.b16 %v108
    %v148 = vunpack.c.l.b16 %v109
    %v149 = vunpack.c.l.b16 %v110
    %v150 = vunpack.c.l.b16 %v111
    %v151 = vunpack.c.l.b16 %v112
    %v152 = vunpack.c.l.b16 %v113
    %v153 = vunpack.c.l.b16 %v114
    %v154 = vpack.c.b16 %v139, %v138
    %v155 = vpack.c.b16 %v141, %v140
    %v156 = vpack.c.b16 %v143, %v142
    %v157 = vpack.c.b16 %v145, %v144
    %v158 = vpack.c.b16 %v147, %v146
    %v159 = vpack.c.b16 %v149, %v148
    %v160 = vpack.c.b16 %v151, %v150
    %v161 = vpack.c.b16 %v153, %v152
    %170 = vmatprep.subr.bf16.mxu0 0
    %171 = vmatpush1.bf16.msra.mxu0 %v161
    %172 = vmatprep.subr.bf16.mxu0 0
    %173 = vmatpush1.bf16.msra.mxu0 %v160
    %174 = vmatprep.subr.bf16.mxu0 0
    %175 = vmatpush1.bf16.msra.mxu0 %v159
    %176 = vmatprep.subr.bf16.mxu0 0
    %177 = vmatpush1.bf16.msra.mxu0 %v158
    %178 = vmatprep.subr.bf16.mxu0 0
    %179 = vmatpush1.bf16.msra.mxu0 %v157
    %180 = vmatprep.subr.bf16.mxu0 0
    %181 = vmatpush1.bf16.msra.mxu0 %v156
    %182 = vmatprep.subr.bf16.mxu0 0
    %183 = vmatpush1.bf16.msra.mxu0 %v155
    %184 = vmatprep.subr.bf16.mxu0 0
    %185 = vmatpush1.bf16.msra.mxu0 %v154
    %186 = vmatprep.subr.bf16.mxu0 0
    %187 = vmatpush2.bf16.msra.mxu0 0
    %188 = vmatprep.subr.bf16.mxu0 0
    %189 = vmatpush2.bf16.msra.mxu0 0
    %190 = vmatprep.subr.bf16.mxu0 0
    %191 = vmatpush2.bf16.msra.mxu0 0
    %192 = vmatprep.subr.bf16.mxu0 0
    %193 = vmatpush2.bf16.msra.mxu0 0
    %194 = vmatprep.subr.bf16.mxu0 0
    %195 = vmatpush2.bf16.msra.mxu0 0
    %196 = vmatprep.subr.bf16.mxu0 0
    %197 = vmatpush2.bf16.msra.mxu0 0
    %198 = vmatprep.subr.bf16.mxu0 0
    %199 = vmatpush2.bf16.msra.mxu0 0
    %200 = vmatprep.subr.bf16.mxu0 0
    %201 = vmatpush2.bf16.msra.mxu0 0
    %202 = vmatprep.mubr.bf16.mxu0 0
    %203 = vmatmul.mubr.bf16.gmra.mxu0 %v98
    %v204 = vpop.f32.mrf.mxu0
    %v205 = vadd.f32 %v120, %v204
    %v206 = vpop.f32.mrf.mxu0
    %v207 = vpop.f32.mrf.mxu0
    %v208 = vadd.f32 %v120, %v207
    %v209 = vpop.f32.mrf.mxu0
    %210 = vdwg.mxu0
    %211 = vst [vmem:[#allocation7] sm:$0xff] %v205
    %212 = vst [vmem:[#allocation7 + $0x8] sm:$0xff] %v208
    // Predicated region
    $region30: #{_prenorm_call.1} parent=1 // pred_check
      _
    $region31: #{_prenorm_call.1} parent=1 // pred_check_branch
      %214 = sbr.rel (0) target = $region33
    $region32: #{_prenorm_call.1} parent=1 // pred_region
      %s216 = ssub.s32 256, 256
      %217 = vsyncadd [#allocation4], %s216
      %s218 = sshll.u32 [#allocation7], 4
      %s219 = int_to_ptr.vmem [resolvable:$true] %s218
      %224 = dma.vmem_to_hbm [thread:$0]  %s219, 256, %s5, [#allocation4], 128, 128, 8
    $region33: #{_prenorm_call.1} parent=1 // pred_fallthru
      _
    // Predicated region
    $region34: #{_prenorm_call.1} parent=1 // pred_check
      _
    $region35: #{_prenorm_call.1} parent=1 // pred_check_branch
      %226 = sbr.rel (0) target = $region37
    $region36: #{_prenorm_call.1} parent=1 // pred_region
      %227 = dma.done [#allocation4], 256
    $region37: #{_prenorm_call.1} parent=1 // pred_fallthru
      _
    %228 = vsyncpa [#allocation3], 1
    %229 = vsyncpa [#allocation6], 1
    %230 = vsyncpa [#allocation4], 1

</llo_original>
